<compile_context>
chip_gen: v6e
topology: v6e:2x2x1
jax: 0.10.0
libtpu: 0.0.40
codegen_flags: <defaults>
</compile_context>

<pallas_src>
import functools

import jax
import jax.numpy as jnp
from jax.experimental import pallas as pl
from jax.experimental.pallas import tpu as pltpu

_INV_SQRT2 = 0.7071067811865476


def _gelu_exact(x):
    # erf-based GELU (torch.nn.functional.gelu default / Megatron non-fused path).
    return 0.5 * x * (1.0 + jax.lax.erf(x * jnp.asarray(_INV_SQRT2, x.dtype)))


def _pick_tile(dim, candidates):
    """Largest candidate that evenly divides `dim`; fall back to the full dim."""
    for t in candidates:
        if t <= dim and dim % t == 0:
            return t
    return dim


def _vmem_bytes(tm, tf, hdim, compute_itemsize, out_itemsize):
    """Rough per-call VMEM footprint: double-buffered blocks + f32 accumulator."""
    x_b = 2 * tm * hdim * compute_itemsize
    w1_b = 2 * tf * hdim * compute_itemsize
    b1_b = 2 * tf * 4
    w2_b = 2 * hdim * tf * compute_itemsize
    o_b = 2 * tm * hdim * out_itemsize
    acc_b = tm * hdim * 4
    return x_b + w1_b + b1_b + w2_b + o_b + acc_b


def mlp_kernel(x_ref, w1_ref, b1_ref, w2_ref, o_ref, acc_ref):
    # x_ref:   [tm, H]   token tile
    # w1_ref:  [tf, H]   dense_h_to_4h weight tile (native layout)
    # b1_ref:  [1,  tf]  dense_h_to_4h bias slice (f32)
    # w2_ref:  [H,  tf]  dense_4h_to_h weight tile (native layout)
    # o_ref:   [tm, H]   output tile (written once, at the last FFN step)
    # acc_ref: [tm, H]   f32 accumulator, persistent across the FFN (k) axis
    k = pl.program_id(1)

    @pl.when(k == 0)
    def _():
        acc_ref[...] = jnp.zeros_like(acc_ref)

    x = x_ref[...]
    w1 = w1_ref[...]
    w2 = w2_ref[...]

    # h_tile = x @ W1_tile^T + b1_tile   -> [tm, tf], f32 accumulation on MXU.
    h = jax.lax.dot_general(
        x, w1, (((1,), (1,)), ((), ())),
        preferred_element_type=jnp.float32)
    h = h + b1_ref[...].astype(jnp.float32)
    h = _gelu_exact(h)  # GELU kept in f32 (safe on v5e: no bf16 VPU/EUP path)

    # acc += h_tile @ W2_tile^T          -> [tm, H]
    acc_ref[...] += jax.lax.dot_general(
        h.astype(x.dtype), w2, (((1,), (1,)), ((), ())),
        preferred_element_type=jnp.float32)

    # NOTE: dense_4h_to_h bias is NOT added (ParallelMLP returns it separately
    # and mlp_tp.forward discards it).
    @pl.when(k == pl.num_programs(1) - 1)
    def _():
        o_ref[...] = acc_ref[...].astype(o_ref.dtype)


@functools.partial(jax.jit, static_argnames=("compute_dtype", "tm", "tf"))
def mlp_tp_forward(hidden_states, w1, b1, w2, *, compute_dtype=None,
                   tm=None, tf=None):
    """hidden_states: [seq, batch, H]; w1: [4H, H]; b1: [4H]; w2: [H, 4H]."""
    s, b, hdim = hidden_states.shape
    ffn = w1.shape[0]
    tokens = s * b

    out_dtype = hidden_states.dtype
    if compute_dtype is None:
        compute_dtype = hidden_states.dtype

    x2d = hidden_states.reshape(tokens, hdim).astype(compute_dtype)
    w1c = w1.astype(compute_dtype)           # [4H, H], native layout (no transpose)
    w2c = w2.astype(compute_dtype)           # [H, 4H], native layout (no transpose)
    b1_2d = b1.reshape(1, ffn).astype(jnp.float32)

    c_isz = jnp.dtype(compute_dtype).itemsize
    o_isz = jnp.dtype(out_dtype).itemsize

    # Tile sizes: multiples of the MXU/vreg granularity, largest that divide the
    # problem, then shrunk to respect a VMEM budget valid on all chips.
    if tm is None:
        tm = _pick_tile(tokens, (256, 128, 64, 32, 16, 8))
    if tf is None:
        tf = _pick_tile(ffn, (512, 384, 256, 128))

    budget = 40 * 1024 * 1024
    # Shrink the FFN tile first (weight tiles dominate VMEM), then the token tile.
    while _vmem_bytes(tm, tf, hdim, c_isz, o_isz) > budget and tf % 256 == 0:
        tf //= 2
    while _vmem_bytes(tm, tf, hdim, c_isz, o_isz) > budget and tm % 16 == 0:
        tm //= 2

    grid = (tokens // tm, ffn // tf)

    cost = pl.CostEstimate(
        flops=4 * tokens * hdim * ffn,          # two GEMMs
        transcendentals=tokens * ffn,           # erf per intermediate element
        bytes_accessed=(x2d.size * c_isz + w1c.size * c_isz
                        + w2c.size * c_isz + b1_2d.size * 4
                        + tokens * hdim * o_isz),
    )

    out2d = pl.pallas_call(
        mlp_kernel,
        out_shape=jax.ShapeDtypeStruct((tokens, hdim), out_dtype),
        grid_spec=pltpu.PrefetchScalarGridSpec(
            num_scalar_prefetch=0,
            grid=grid,
            in_specs=[
                pl.BlockSpec((tm, hdim), lambda i, k: (i, 0)),   # x tile
                pl.BlockSpec((tf, hdim), lambda i, k: (k, 0)),   # W1 tile (native)
                pl.BlockSpec((1, tf), lambda i, k: (0, k)),      # b1 slice
                pl.BlockSpec((hdim, tf), lambda i, k: (0, k)),   # W2 tile (native)
            ],
            out_specs=pl.BlockSpec((tm, hdim), lambda i, k: (i, 0)),
            scratch_shapes=[pltpu.VMEM((tm, hdim), jnp.float32)],
        ),
        compiler_params=pltpu.CompilerParams(
            dimension_semantics=("parallel", "arbitrary"),
            vmem_limit_bytes=48 * 1024 * 1024,
        ),
        cost_estimate=cost,
    )(x2d, w1c, b1_2d, w2c)

    return out2d.reshape(s, b, hdim)


if __name__ == "__main__":
    # Small shapes consistent with the module: seq=8, batch=2, hidden=32, ffn=4*hidden.
    seq, batch, hidden = 8, 2, 32
    ffn = 4 * hidden

    key = jax.random.PRNGKey(0)
    hidden_states = jax.random.normal(key, (seq, batch, hidden), dtype=jnp.float32)

    # Deterministic parameter init matching init_method_constant(1) for weights,
    # zero init for biases (Megatron default bias init).
    w1 = jnp.ones((ffn, hidden), dtype=jnp.float32)   # dense_h_to_4h.weight
    b1 = jnp.zeros((ffn,), dtype=jnp.float32)         # dense_h_to_4h.bias
    w2 = jnp.ones((hidden, ffn), dtype=jnp.float32)   # dense_4h_to_h.weight
    # dense_4h_to_h.bias exists but is returned separately and discarded.

    # --- f32 path: exact match against a pure-JAX reference -----------------
    out = jax.block_until_ready(mlp_tp_forward(hidden_states, w1, b1, w2))
    x2d = hidden_states.reshape(-1, hidden)
    ref = (_gelu_exact(x2d @ w1.T + b1) @ w2.T).reshape(seq, batch, hidden)
    assert jnp.allclose(out, ref, rtol=1e-5, atol=1e-4), "f32 mismatch vs reference"

    # --- bf16 MXU-input path: f32 GELU + f32 accumulation --------------------
    out_bf = jax.block_until_ready(
        mlp_tp_forward(hidden_states, w1, b1, w2, compute_dtype=jnp.bfloat16))
    xb = x2d.astype(jnp.bfloat16)
    w1b = w1.astype(jnp.bfloat16)
    w2b = w2.astype(jnp.bfloat16)
    hb = _gelu_exact(jnp.dot(xb, w1b.T, preferred_element_type=jnp.float32) + b1)
    ref_bf = jnp.dot(hb.astype(jnp.bfloat16), w2b.T,
                     preferred_element_type=jnp.float32).reshape(seq, batch, hidden)
    assert jnp.allclose(out_bf.astype(jnp.float32), ref_bf,
                        rtol=5e-2, atol=5e-2), "bf16 mismatch vs reference"

    print("KERNEL_OK")
</pallas_src>

<mosaic_0001>
module attributes {stable_mosaic.version = 11 : i64} {
  func.func @mlp_kernel(%arg0: i32, %arg1: i32, %arg2: memref<16x32xf32, #tpu.memory_space<vmem>>, %arg3: memref<128x32xf32, #tpu.memory_space<vmem>>, %arg4: memref<1x128xf32, #tpu.memory_space<vmem>>, %arg5: memref<32x128xf32, #tpu.memory_space<vmem>>, %arg6: memref<16x32xf32, #tpu.memory_space<vmem>>, %arg7: memref<16x32xf32, #tpu.memory_space<vmem>>) attributes {dimension_semantics = [#tpu.dimension_semantics<parallel>, #tpu.dimension_semantics<arbitrary>], iteration_bounds = array<i64: 1, 1>, scalar_prefetch = 0 : i64, scratch_operands = 1 : i64, tpu.core_type = #tpu.core_type<tc>, window_params = [{transform_indices = @transform_0, window_bounds = array<i64: 16, 32>}, {transform_indices = @transform_1, window_bounds = array<i64: 128, 32>}, {transform_indices = @transform_2, window_bounds = array<i64: 1, 128>}, {transform_indices = @transform_3, window_bounds = array<i64: 32, 128>}, {transform_indices = @transform_4, window_bounds = array<i64: 16, 32>}]} {
    %c0_i32 = arith.constant 0 : i32
    %0 = arith.cmpi eq, %arg1, %c0_i32 : i32
    %1 = arith.extui %0 : i1 to i32
    %c0_i32_0 = arith.constant 0 : i32
    %2 = arith.cmpi ne, %1, %c0_i32_0 : i32
    scf.if %2 {
      %cst_18 = arith.constant 0.000000e+00 : f32
      %25 = vector.broadcast %cst_18 : f32 to vector<16x32xf32>
      %c0_19 = arith.constant 0 : index
      %c0_20 = arith.constant 0 : index
      %26 = vector.load %arg7[%c0_19, %c0_20] : memref<16x32xf32, #tpu.memory_space<vmem>>, vector<16x32xf32>
      tpu.vector_store %arg7[%c0_19, %c0_20], %25 {strides = array<i32>} : memref<16x32xf32, #tpu.memory_space<vmem>>, vector<16x32xf32>,
    } else {
    }
    %c0 = arith.constant 0 : index
    %c0_1 = arith.constant 0 : index
    %3 = vector.load %arg2[%c0, %c0_1] : memref<16x32xf32, #tpu.memory_space<vmem>>, vector<16x32xf32>
    %c0_2 = arith.constant 0 : index
    %c0_3 = arith.constant 0 : index
    %4 = vector.load %arg3[%c0_2, %c0_3] : memref<128x32xf32, #tpu.memory_space<vmem>>, vector<128x32xf32>
    %c0_4 = arith.constant 0 : index
    %c0_5 = arith.constant 0 : index
    %5 = vector.load %arg5[%c0_4, %c0_5] : memref<32x128xf32, #tpu.memory_space<vmem>>, vector<32x128xf32>
    %cst = arith.constant dense<0.000000e+00> : vector<16x128xf32>
    %6 = tpu.matmul %3, %4, %cst {dimension_numbers = #tpu.dot_dimension_numbers<[1], [1], [0], [0], [0, 0, 1, 0], [], []>} : vector<16x32xf32>, vector<128x32xf32>, vector<16x128xf32> -> vector<16x128xf32>
    %c0_6 = arith.constant 0 : index
    %c0_7 = arith.constant 0 : index
    %7 = vector.load %arg4[%c0_6, %c0_7] : memref<1x128xf32, #tpu.memory_space<vmem>>, vector<1x128xf32>
    %8 = vector.broadcast %7 : vector<1x128xf32> to vector<16x128xf32>
    %9 = arith.addf %6, %8 : vector<16x128xf32>
    %cst_8 = arith.constant 5.000000e-01 : f32
    %10 = vector.broadcast %cst_8 : f32 to vector<16x128xf32>
    %11 = arith.mulf %10, %9 : vector<16x128xf32>
    %cst_9 = arith.constant 0.707106769 : f32
    %12 = vector.broadcast %cst_9 : f32 to vector<16x128xf32>
    %13 = arith.mulf %9, %12 : vector<16x128xf32>
    %14 = math.erf %13 : vector<16x128xf32>
    %cst_10 = arith.constant 1.000000e+00 : f32
    %15 = vector.broadcast %cst_10 : f32 to vector<16x128xf32>
    %16 = arith.addf %15, %14 : vector<16x128xf32>
    %17 = arith.mulf %11, %16 : vector<16x128xf32>
    %c0_11 = arith.constant 0 : index
    %c0_12 = arith.constant 0 : index
    %18 = vector.load %arg7[%c0_11, %c0_12] : memref<16x32xf32, #tpu.memory_space<vmem>>, vector<16x32xf32>
    %cst_13 = arith.constant dense<0.000000e+00> : vector<16x32xf32>
    %19 = tpu.matmul %17, %5, %cst_13 {dimension_numbers = #tpu.dot_dimension_numbers<[1], [1], [0], [0], [0, 0, 1, 0], [], []>} : vector<16x128xf32>, vector<32x128xf32>, vector<16x32xf32> -> vector<16x32xf32>
    %20 = arith.addf %18, %19 : vector<16x32xf32>
    %c0_14 = arith.constant 0 : index
    %c0_15 = arith.constant 0 : index
    %21 = vector.load %arg7[%c0_14, %c0_15] : memref<16x32xf32, #tpu.memory_space<vmem>>, vector<16x32xf32>
    tpu.vector_store %arg7[%c0_14, %c0_15], %20 {strides = array<i32>} : memref<16x32xf32, #tpu.memory_space<vmem>>, vector<16x32xf32>,
    %c0_i32_16 = arith.constant 0 : i32
    %22 = arith.cmpi eq, %arg1, %c0_i32_16 : i32
    %23 = arith.extui %22 : i1 to i32
    %c0_i32_17 = arith.constant 0 : i32
    %24 = arith.cmpi ne, %23, %c0_i32_17 : i32
    scf.if %24 {
      %c0_18 = arith.constant 0 : index
      %c0_19 = arith.constant 0 : index
      %25 = vector.load %arg7[%c0_18, %c0_19] : memref<16x32xf32, #tpu.memory_space<vmem>>, vector<16x32xf32>
      %c0_20 = arith.constant 0 : index
      %c0_21 = arith.constant 0 : index
      %26 = vector.load %arg6[%c0_20, %c0_21] : memref<16x32xf32, #tpu.memory_space<vmem>>, vector<16x32xf32>
      tpu.vector_store %arg6[%c0_20, %c0_21], %25 {strides = array<i32>} : memref<16x32xf32, #tpu.memory_space<vmem>>, vector<16x32xf32>,
    } else {
    }
    return
  }
  func.func @transform_0(%arg0: i32, %arg1: i32) -> (i32, i32) {
    %c0_i32 = arith.constant 0 : i32
    %c0_i32_0 = arith.constant 0 : i32
    return %arg0, %c0_i32 : i32, i32
  }
  func.func @transform_1(%arg0: i32, %arg1: i32) -> (i32, i32) {
    %c0_i32 = arith.constant 0 : i32
    %c0_i32_0 = arith.constant 0 : i32
    return %arg1, %c0_i32 : i32, i32
  }
  func.func @transform_2(%arg0: i32, %arg1: i32) -> (i32, i32) {
    %c0_i32 = arith.constant 0 : i32
    %c0_i32_0 = arith.constant 0 : i32
    return %c0_i32, %arg1 : i32, i32
  }
  func.func @transform_3(%arg0: i32, %arg1: i32) -> (i32, i32) {
    %c0_i32 = arith.constant 0 : i32
    %c0_i32_0 = arith.constant 0 : i32
    return %c0_i32, %arg1 : i32, i32
  }
  func.func @transform_4(%arg0: i32, %arg1: i32) -> (i32, i32) {
    %c0_i32 = arith.constant 0 : i32
    %c0_i32_0 = arith.constant 0 : i32
    return %arg0, %c0_i32 : i32, i32
  }
}

</mosaic_0001>

<llo_original>
// kernel: mlp_tp_forward.1
$region0: #{mlp_tp_forward.1}
  #allocation0 [shape = 'u32[]', space=smem, size = 0x4, offset = 0x4, fixed_abs, tag = 'smem constant byte address 0x4 - core index']
  #allocation1 [shape = 'u32[144,128]{1,0:T(1,128)}', space=vmem, size = 0x12000, scoped, tag = 'internal scratch']
  #allocation2 [shape = 'f32[16,32]{1,0:T(8,128)}', space=vmem, size = 0x2000, scoped, tag = 'scratch operand']
  %s0 = inlined_call_operand.vmem [shape: f32[16,32], index: 0, kind: input, shape index: {}]
  %s1 = inlined_call_operand.vmem [shape: f32[128,32], index: 1, kind: input, shape index: {}]
  %s2 = inlined_call_operand.vmem [shape: f32[1,128], index: 2, kind: input, shape index: {}]
  %s3 = inlined_call_operand.vmem [shape: f32[32,128], index: 3, kind: input, shape index: {}]
  %s4 = inlined_call_operand.hbm [shape: f32[16,32], index: 4, kind: output, shape index: {}]
  %s5 = sld [smem:[#allocation0]]
  $region34: #{mlp_tp_forward.1} parent=0
    _
  %s7 = ssub.s32 1, %s5
  %s8 = scalar_select 0, %s7, %s5
  $region1: #{mlp_tp_forward.1} parent=0
    #allocation3 [shape = 'u8[8192]{0}', space=vmem, size = 0x2000, scoped, tag = 'output window, operand 0, single buffered']
    #allocation4 [shape = 's32[1]{0}', space=sflag, size = 0x4, scoped, tag = 'scoped memory for mlp_tp_forward.1']
    %9 = vsyncpa [#allocation4], 0
    // Predicated region
    $region2: #{mlp_tp_forward.1} parent=1 // pred_check
      _
    $region3: #{mlp_tp_forward.1} parent=1 // pred_check_branch
      %11 = sbr.rel (0) target = $region5
    $region4: #{mlp_tp_forward.1} parent=1 // pred_region
      _
    $region5: #{mlp_tp_forward.1} parent=1 // pred_fallthru
      _
    // Predicated region
    $region6: #{mlp_tp_forward.1} parent=1 // pred_check
      _
    $region7: #{mlp_tp_forward.1} parent=1 // pred_check_branch
      %13 = sbr.rel (0) target = $region9
    $region8: #{mlp_tp_forward.1} parent=1 // pred_region
      _
    $region9: #{mlp_tp_forward.1} parent=1 // pred_fallthru
      _
    // Predicated region
    $region10: #{mlp_tp_forward.1} parent=1 // pred_check
      _
    $region11: #{mlp_tp_forward.1} parent=1 // pred_check_branch
      %15 = sbr.rel (0) target = $region13
    $region12: #{mlp_tp_forward.1} parent=1 // pred_region
      _
    $region13: #{mlp_tp_forward.1} parent=1 // pred_fallthru
      _
    // Predicated region
    $region14: #{mlp_tp_forward.1} parent=1 // pred_check
      _
    $region15: #{mlp_tp_forward.1} parent=1 // pred_check_branch
      %17 = sbr.rel (0) target = $region17
    $region16: #{mlp_tp_forward.1} parent=1 // pred_region
      _
    $region17: #{mlp_tp_forward.1} parent=1 // pred_fallthru
      _
    %p18 = scmp.eq.s32.totalorder 0, 0
    // Predicated region
    $region18: #{mlp_tp_forward.1} parent=1 // pred_check
      %p19 = pneg %p18
    $region19: #{mlp_tp_forward.1} parent=1 // pred_check_branch
      %21 = sbr.rel (%p19) target = $region21
    $region20: #{mlp_tp_forward.1} parent=1 // pred_region
      %vm22 = vcmask 261120
      %23 = vst.msk [vmem:[#allocation2] sm:$0xff] %vm22, 0.0
      %24 = vst.msk [vmem:[#allocation2 + $0x8] sm:$0xff] %vm22, 0.0
    $region21: #{mlp_tp_forward.1} parent=1 // pred_fallthru
      _
    %v25 = vld [vmem:[%s0] sm:$0xff]
    %v26 = vld [vmem:[%s0 + $0x8] sm:$0xff]
    %v27 = vld [vmem:[%s1] sm:$0xff]
    %v28 = vld [vmem:[%s1 + $0x8] sm:$0xff]
    %v29 = vld [vmem:[%s1 + $0x10] sm:$0xff]
    %v30 = vld [vmem:[%s1 + $0x18] sm:$0xff]
    %v31 = vld [vmem:[%s1 + $0x20] sm:$0xff]
    %v32 = vld [vmem:[%s1 + $0x28] sm:$0xff]
    %v33 = vld [vmem:[%s1 + $0x30] sm:$0xff]
    %v34 = vld [vmem:[%s1 + $0x38] sm:$0xff]
    %v35 = vld [vmem:[%s1 + $0x40] sm:$0xff]
    %v36 = vld [vmem:[%s1 + $0x48] sm:$0xff]
    %v37 = vld [vmem:[%s1 + $0x50] sm:$0xff]
    %v38 = vld [vmem:[%s1 + $0x58] sm:$0xff]
    %v39 = vld [vmem:[%s1 + $0x60] sm:$0xff]
    %v40 = vld [vmem:[%s1 + $0x68] sm:$0xff]
    %v41 = vld [vmem:[%s1 + $0x70] sm:$0xff]
    %v42 = vld [vmem:[%s1 + $0x78] sm:$0xff]
    %v43 = vld [vmem:[%s3] sm:$0xff]
    %v44 = vld [vmem:[%s3 + $0x8] sm:$0xff]
    %v45 = vld [vmem:[%s3 + $0x10] sm:$0xff]
    %v46 = vld [vmem:[%s3 + $0x18] sm:$0xff]
    %v47 = vld [vmem:[%s2] sm:$0x1]
    %v49 = vlaneseq
    %v50 = vshrl.u32 %v49, 7
    %v51 = vsub.s32 0, %v50
    %v52 = vrot.slane %v47, %v51
    %vm54 = vcmask 261120
    %v56 = vsel %vm54, %v25, 0
    %v59 = vsel %vm54, %v26, 0
    %v62 = vsel %vm54, %v27, 0
    %v65 = vsel %vm54, %v28, 0
    %v68 = vsel %vm54, %v29, 0
    %v71 = vsel %vm54, %v30, 0
    %v74 = vsel %vm54, %v31, 0
    %v77 = vsel %vm54, %v32, 0
    %v80 = vsel %vm54, %v33, 0
    %v83 = vsel %vm54, %v34, 0
    %v86 = vsel %vm54, %v35, 0
    %v89 = vsel %vm54, %v36, 0
    %v92 = vsel %vm54, %v37, 0
    %v95 = vsel %vm54, %v38, 0
    %v98 = vsel %vm54, %v39, 0
    %v101 = vsel %vm54, %v40, 0
    %v104 = vsel %vm54, %v41, 0
    %v107 = vsel %vm54, %v42, 0
    %109 = vmatprep.subr.mxu0 0.0
    %110 = vmatpush1.xpose.msra.mxu0 %v107
    %111 = vmatprep.subr.mxu0 0.0
    %112 = vmatpush1.xpose.msra.mxu0 %v104
    %113 = vmatprep.subr.mxu0 0.0
    %114 = vmatpush1.xpose.msra.mxu0 %v101
    %115 = vmatprep.subr.mxu0 0.0
    %116 = vmatpush1.xpose.msra.mxu0 %v98
    %117 = vmatprep.subr.mxu0 0.0
    %118 = vmatpush1.xpose.msra.mxu0 %v95
    %119 = vmatprep.subr.mxu0 0.0
    %120 = vmatpush1.xpose.msra.mxu0 %v92
    %121 = vmatprep.subr.mxu0 0.0
    %122 = vmatpush1.xpose.msra.mxu0 %v89
    %123 = vmatprep.subr.mxu0 0.0
    %124 = vmatpush1.xpose.msra.mxu0 %v86
    %125 = vmatprep.subr.mxu0 0.0
    %126 = vmatpush1.xpose.msra.mxu0 %v83
    %127 = vmatprep.subr.mxu0 0.0
    %128 = vmatpush1.xpose.msra.mxu0 %v80
    %129 = vmatprep.subr.mxu0 0.0
    %130 = vmatpush1.xpose.msra.mxu0 %v77
    %131 = vmatprep.subr.mxu0 0.0
    %132 = vmatpush1.xpose.msra.mxu0 %v74
    %133 = vmatprep.subr.mxu0 0.0
    %134 = vmatpush1.xpose.msra.mxu0 %v71
    %135 = vmatprep.subr.mxu0 0.0
    %136 = vmatpush1.xpose.msra.mxu0 %v68
    %137 = vmatprep.subr.mxu0 0.0
    %138 = vmatpush1.xpose.msra.mxu0 %v65
    %139 = vmatprep.subr.mxu0 0.0
    %140 = vmatpush1.xpose.msra.mxu0 %v62
    %141 = vmatprep.subr.mxu0 0.0
    %142 = vmatpush2.xpose.msra.mxu0 0.0
    %143 = vmatprep.subr.mxu0 0.0
    %144 = vmatpush2.xpose.msra.mxu0 0.0
    %145 = vmatprep.subr.mxu0 0.0
    %146 = vmatpush2.xpose.msra.mxu0 0.0
    %147 = vmatprep.subr.mxu0 0.0
    %148 = vmatpush2.xpose.msra.mxu0 0.0
    %149 = vmatprep.subr.mxu0 0.0
    %150 = vmatpush2.xpose.msra.mxu0 0.0
    %151 = vmatprep.subr.mxu0 0.0
    %152 = vmatpush2.xpose.msra.mxu0 0.0
    %153 = vmatprep.subr.mxu0 0.0
    %154 = vmatpush2.xpose.msra.mxu0 0.0
    %155 = vmatprep.subr.mxu0 0.0
    %156 = vmatpush2.xpose.msra.mxu0 0.0
    %157 = vmatprep.subr.mxu0 0.0
    %158 = vmatpush2.xpose.msra.mxu0 0.0
    %159 = vmatprep.subr.mxu0 0.0
    %160 = vmatpush2.xpose.msra.mxu0 0.0
    %161 = vmatprep.subr.mxu0 0.0
    %162 = vmatpush2.xpose.msra.mxu0 0.0
    %163 = vmatprep.subr.mxu0 0.0
    %164 = vmatpush2.xpose.msra.mxu0 0.0
    %165 = vmatprep.subr.mxu0 0.0
    %166 = vmatpush2.xpose.msra.mxu0 0.0
    %167 = vmatprep.subr.mxu0 0.0
    %168 = vmatpush2.xpose.msra.mxu0 0.0
    %169 = vmatprep.subr.mxu0 0.0
    %170 = vmatpush2.xpose.msra.mxu0 0.0
    %171 = vmatprep.subr.mxu0 0.0
    %172 = vmatpush2.xpose.msra.mxu0 0.0
    %173 = vmatprep.mubr.f32.mxu0 0.0
    %174 = vmatmul.mubr.f32.gmra.mxu0 %v56
    %v175 = vpop.f32.mrf.mxu0
    %v176 = vadd.f32 %v52, %v175
    %v177 = vpop.f32.mrf.mxu0
    %178 = vmatprep.mubr.f32.mxu0 0.0
    %179 = vmatmul.mubr.f32.gmra.mxu0 %v59
    %v180 = vpop.f32.mrf.mxu0
    %v181 = vadd.f32 %v52, %v180
    %v182 = vpop.f32.mrf.mxu0
    %183 = vdwg.mxu0
    %v184 = vmul.f32 %v176, 0.5
    %v185 = vmul.f32 %v181, 0.5
    %v186 = vmul.f32 %v176, 0.70710677
    %v187 = vmul.f32 %v181, 0.70710677
    %v188 = verf.f32.pop %v186
    %v189 = verf.f32.pop %v187
    %v190 = vadd.f32 %v188, 1.0
    %v191 = vadd.f32 %v189, 1.0
    %v192 = vmul.f32 %v184, %v190
    %v193 = vmul.f32 %v185, %v191
    %v194 = vld [vmem:[#allocation2] sm:$0xff]
    %v195 = vld [vmem:[#allocation2 + $0x8] sm:$0xff]
    %196 = vmatprep.subr.mxu0 0.0
    %197 = vmatpush1.xpose.msra.mxu0 0.0
    %198 = vmatprep.subr.mxu0 0.0
    %199 = vmatpush1.xpose.msra.mxu0 0.0
    %200 = vmatprep.subr.mxu0 0.0
    %201 = vmatpush1.xpose.msra.mxu0 0.0
    %202 = vmatprep.subr.mxu0 0.0
    %203 = vmatpush1.xpose.msra.mxu0 0.0
    %204 = vmatprep.subr.mxu0 0.0
    %205 = vmatpush1.xpose.msra.mxu0 0.0
    %206 = vmatprep.subr.mxu0 0.0
    %207 = vmatpush1.xpose.msra.mxu0 0.0
    %208 = vmatprep.subr.mxu0 0.0
    %209 = vmatpush1.xpose.msra.mxu0 0.0
    %210 = vmatprep.subr.mxu0 0.0
    %211 = vmatpush1.xpose.msra.mxu0 0.0
    %212 = vmatprep.subr.mxu0 0.0
    %213 = vmatpush1.xpose.msra.mxu0 0.0
    %214 = vmatprep.subr.mxu0 0.0
    %215 = vmatpush1.xpose.msra.mxu0 0.0
    %216 = vmatprep.subr.mxu0 0.0
    %217 = vmatpush1.xpose.msra.mxu0 0.0
    %218 = vmatprep.subr.mxu0 0.0
    %219 = vmatpush1.xpose.msra.mxu0 0.0
    %220 = vmatprep.subr.mxu0 0.0
    %221 = vmatpush1.xpose.msra.mxu0 %v46
    %222 = vmatprep.subr.mxu0 0.0
    %223 = vmatpush1.xpose.msra.mxu0 %v45
    %224 = vmatprep.subr.mxu0 0.0
    %225 = vmatpush1.xpose.msra.mxu0 %v44
    %226 = vmatprep.subr.mxu0 0.0
    %227 = vmatpush1.xpose.msra.mxu0 %v43
    %228 = vmatprep.subr.mxu0 0.0
    %229 = vmatpush2.xpose.msra.mxu0 0.0
    %230 = vmatprep.subr.mxu0 0.0
    %231 = vmatpush2.xpose.msra.mxu0 0.0
    %232 = vmatprep.subr.mxu0 0.0
    %233 = vmatpush2.xpose.msra.mxu0 0.0
    %234 = vmatprep.subr.mxu0 0.0
    %235 = vmatpush2.xpose.msra.mxu0 0.0
    %236 = vmatprep.subr.mxu0 0.0
    %237 = vmatpush2.xpose.msra.mxu0 0.0
    %238 = vmatprep.subr.mxu0 0.0
    %239 = vmatpush2.xpose.msra.mxu0 0.0
    %240 = vmatprep.subr.mxu0 0.0
    %241 = vmatpush2.xpose.msra.mxu0 0.0
    %242 = vmatprep.subr.mxu0 0.0
    %243 = vmatpush2.xpose.msra.mxu0 0.0
    %244 = vmatprep.subr.mxu0 0.0
    %245 = vmatpush2.xpose.msra.mxu0 0.0
    %246 = vmatprep.subr.mxu0 0.0
    %247 = vmatpush2.xpose.msra.mxu0 0.0
    %248 = vmatprep.subr.mxu0 0.0
    %249 = vmatpush2.xpose.msra.mxu0 0.0
    %250 = vmatprep.subr.mxu0 0.0
    %251 = vmatpush2.xpose.msra.mxu0 0.0
    %252 = vmatprep.subr.mxu0 0.0
    %253 = vmatpush2.xpose.msra.mxu0 0.0
    %254 = vmatprep.subr.mxu0 0.0
    %255 = vmatpush2.xpose.msra.mxu0 0.0
    %256 = vmatprep.subr.mxu0 0.0
    %257 = vmatpush2.xpose.msra.mxu0 0.0
    %258 = vmatprep.subr.mxu0 0.0
    %259 = vmatpush2.xpose.msra.mxu0 0.0
    %260 = vmatprep.mubr.f32.mxu0 0.0
    %261 = vmatmul.mubr.f32.gmra.mxu0 %v192
    %v262 = vpop.f32.mrf.mxu0
    %v263 = vadd.f32 0.0, %v262
    %v264 = vpop.f32.mrf.mxu0
    %265 = vmatprep.mubr.f32.mxu0 0.0
    %266 = vmatmul.mubr.f32.gmra.mxu0 %v193
    %v267 = vpop.f32.mrf.mxu0
    %v268 = vadd.f32 0.0, %v267
    %v269 = vpop.f32.mrf.mxu0
    %270 = vdwg.mxu0
    %v271 = vadd.f32 %v194, %v263
    %v272 = vadd.f32 %v195, %v268
    %273 = vst.msk [vmem:[#allocation2] sm:$0xff] %vm54, %v271
    %274 = vst.msk [vmem:[#allocation2 + $0x8] sm:$0xff] %vm54, %v272
    // Predicated region
    $region22: #{mlp_tp_forward.1} parent=1 // pred_check
      %p275 = pneg %p18
    $region23: #{mlp_tp_forward.1} parent=1 // pred_check_branch
      %277 = sbr.rel (%p275) target = $region25
    $region24: #{mlp_tp_forward.1} parent=1 // pred_region
      %v278 = vld [vmem:[#allocation2] sm:$0xff]
      %v279 = vld [vmem:[#allocation2 + $0x8] sm:$0xff]
      %280 = vst.msk [vmem:[#allocation3] sm:$0xff] %vm54, %v278
      %281 = vst.msk [vmem:[#allocation3 + $0x8] sm:$0xff] %vm54, %v279
    $region25: #{mlp_tp_forward.1} parent=1 // pred_fallthru
      _
    // Predicated region
    $region26: #{mlp_tp_forward.1} parent=1 // pred_check
      _
    $region27: #{mlp_tp_forward.1} parent=1 // pred_check_branch
      %283 = sbr.rel (0) target = $region29
    $region28: #{mlp_tp_forward.1} parent=1 // pred_region
      %s285 = ssub.s32 256, 256
      %286 = vsyncadd [#allocation4], %s285
      %s287 = sshll.u32 [#allocation3], 4
      %s288 = int_to_ptr.vmem [resolvable:$true] %s287
      %293 = dma.vmem_to_hbm [thread:$0]  %s288, 256, %s4, [#allocation4], 128, 128, 8
    $region29: #{mlp_tp_forward.1} parent=1 // pred_fallthru
      _
    // Predicated region
    $region30: #{mlp_tp_forward.1} parent=1 // pred_check
      _
    $region31: #{mlp_tp_forward.1} parent=1 // pred_check_branch
      %295 = sbr.rel (0) target = $region33
    $region32: #{mlp_tp_forward.1} parent=1 // pred_region
      %296 = dma.done [#allocation4], 256
    $region33: #{mlp_tp_forward.1} parent=1 // pred_fallthru
      _
    %297 = vsyncpa [#allocation4], 1

</llo_original>
